<compile_context>
chip_gen: v5e
topology: v5e:2x2
jax: 0.10.0
libtpu: 0.0.40
codegen_flags: <defaults>
</compile_context>

<pallas_src>
import functools

import jax
import jax.numpy as jnp
from jax.experimental import pallas as pl
from jax.experimental.pallas import tpu as pltpu

MIN_RANGE = 1e-6

# VMEM sizing: double-buffered input + double-buffered q output ~= 4 block
# buffers. Keep that under ~24 MiB so it fits v7x's 32 MiB scoped VMEM with
# headroom; explicitly raise the scoped limit (v5e default is only 16 MiB).
_VMEM_WORKING_SET_BUDGET = 24 * 1024 * 1024
_VMEM_LIMIT_BYTES = 32 * 1024 * 1024
_MAX_ROW_TILE = 1024


def _round_up(a, b):
    return ((a + b - 1) // b) * b


def _choose_row_tile(rows, h, dtype):
    """Largest sublane-aligned row tile whose working set fits the VMEM budget."""
    itemsize = jnp.dtype(dtype).itemsize
    sub = max(8, 32 // itemsize)  # sublane packing: 8 rows f32, 16 bf16, 32 int8
    cap = _VMEM_WORKING_SET_BUDGET // max(1, 4 * h * itemsize)
    rt = min(_MAX_ROW_TILE, max(sub, cap), _round_up(rows, sub))
    rt = max(sub, (rt // sub) * sub)
    # TODO(synk): if a single row (4*h*itemsize) ever exceeds the budget, the
    # hidden axis should be blocked too; not needed for transformer widths.
    return rt


# ----------------------------- kernels ------------------------------------ #

def _per_token_kernel(x_ref, q_ref, s_ref, *, qp):
    """Per-row (per-token) symmetric quantization of a [row_tile, H] block."""
    x = x_ref[...].astype(jnp.float32)
    max_x = jnp.max(jnp.abs(x), axis=-1, keepdims=True)
    scale = jnp.maximum(max_x, MIN_RANGE) / qp
    # Exact divide (not reciprocal*multiply) for bit-parity with round(x/s).
    q_ref[...] = jnp.round(x / scale).astype(q_ref.dtype)
    s_ref[...] = scale.astype(s_ref.dtype)


def _abs_max_scale_kernel(x_ref, s_ref, *, qp, rows, row_tile, need_mask):
    """Running global |x| max; last grid step finalizes clamp(1e-6)/Qp."""
    i = pl.program_id(0)

    @pl.when(i == 0)
    def _():
        # Zero init is valid because |x| >= 0 (would need -inf for signed max).
        s_ref[...] = jnp.zeros_like(s_ref)

    ax = jnp.abs(x_ref[...].astype(jnp.float32))
    if need_mask:  # ragged last tile: ignore out-of-bounds (garbage) rows
        row = jax.lax.broadcasted_iota(jnp.int32, ax.shape, 0) + i * row_tile
        ax = jnp.where(row < rows, ax, 0.0)
    s_ref[...] = jnp.maximum(s_ref[...], jnp.max(ax, keepdims=True))

    @pl.when(i == pl.num_programs(0) - 1)
    def _():
        s_ref[...] = jnp.maximum(s_ref[...], MIN_RANGE) / qp


def _apply_scale_kernel(s_ref, x_ref, q_ref):
    """Elementwise q = round(x / s) with a single scalar scale in SMEM."""
    x = x_ref[...].astype(jnp.float32)
    q_ref[...] = jnp.round(x / s_ref[0, 0]).astype(q_ref.dtype)


# ----------------------------- wrappers ------------------------------------ #

def _quant_per_token(x, qp):
    orig_shape = x.shape
    h = orig_shape[-1]
    x2 = x.reshape(-1, h)
    rows = x2.shape[0]
    rt = _choose_row_tile(rows, h, x.dtype)
    n_tiles = pl.cdiv(rows, rt)

    q, s = pl.pallas_call(
        functools.partial(_per_token_kernel, qp=float(qp)),
        out_shape=(
            jax.ShapeDtypeStruct((rows, h), x.dtype),
            jax.ShapeDtypeStruct((rows, 1), jnp.float32),
        ),
        grid=(n_tiles,),
        in_specs=[pl.BlockSpec((rt, h), lambda i: (i, 0))],
        out_specs=(
            pl.BlockSpec((rt, h), lambda i: (i, 0)),
            pl.BlockSpec((rt, 1), lambda i: (i, 0)),
        ),
        compiler_params=pltpu.CompilerParams(
            dimension_semantics=("parallel",),
            vmem_limit_bytes=_VMEM_LIMIT_BYTES),
    )(x2)

    q = q.reshape(orig_shape)                      # free bitcast reshape
    s = s.reshape(orig_shape[:-1] + (1,))
    return q, s


def _quant_per_tensor(x, qp):
    orig_shape = x.shape
    h = orig_shape[-1]
    x2 = x.reshape(-1, h)
    rows = x2.shape[0]
    rt = _choose_row_tile(rows, h, x.dtype)
    n_tiles = pl.cdiv(rows, rt)
    need_mask = (rows % rt) != 0

    # Pass 1: global abs-max reduction + in-kernel clamp/Qp finalize.
    scale = pl.pallas_call(
        functools.partial(_abs_max_scale_kernel, qp=float(qp), rows=rows,
                          row_tile=rt, need_mask=need_mask),
        out_shape=jax.ShapeDtypeStruct((1, 1), jnp.float32),
        grid=(n_tiles,),
        in_specs=[pl.BlockSpec((rt, h), lambda i: (i, 0))],
        out_specs=pl.BlockSpec((1, 1), lambda i: (0, 0)),
        compiler_params=pltpu.CompilerParams(
            dimension_semantics=("arbitrary",),
            vmem_limit_bytes=_VMEM_LIMIT_BYTES),
    )(x2)

    # Pass 2: elementwise quantize with the scalar scale held in SMEM.
    q = pl.pallas_call(
        _apply_scale_kernel,
        out_shape=jax.ShapeDtypeStruct((rows, h), x.dtype),
        grid=(n_tiles,),
        in_specs=[
            pl.BlockSpec(memory_space=pltpu.MemorySpace.SMEM),
            pl.BlockSpec((rt, h), lambda i: (i, 0)),
        ],
        out_specs=pl.BlockSpec((rt, h), lambda i: (i, 0)),
        compiler_params=pltpu.CompilerParams(
            dimension_semantics=("parallel",),
            vmem_limit_bytes=_VMEM_LIMIT_BYTES),
    )(scale, x2)

    return q.reshape(orig_shape), scale[0, 0]


class QuantAct:
    """JAX/Pallas port of the PyTorch QuantAct module (forward only)."""

    def __init__(self, N_bits, type="per_tensor", signed=True, symmetric=True):
        self.N_bits = N_bits
        self.q_type = type
        self.signed = signed
        self.symmetric = symmetric
        if N_bits is None:
            return
        if signed:
            self.Qn = -(2 ** (N_bits - 1))
            self.Qp = 2 ** (N_bits - 1) - 1
        else:
            self.Qn = 0
            self.Qp = 2 ** N_bits - 1

    def __call__(self, x):
        if self.N_bits is None:
            return x, jnp.float32(1.0)
        if not self.symmetric:
            # TODO(synk): asymmetric (zero-point) branch not implemented.
            raise NotImplementedError("asymmetric quantization not implemented")
        if self.q_type == "per_token":
            return _quant_per_token(x, self.Qp)
        if self.q_type == "per_tensor":
            return _quant_per_tensor(x, self.Qp)
        # TODO(synk): per_channel (amax over dim 0) path not implemented.
        raise NotImplementedError(f"unsupported q_type: {self.q_type}")


# ----------------------------- reference + demo ---------------------------- #

def _ref_per_token(x, qp):
    max_x = jnp.maximum(jnp.max(jnp.abs(x), axis=-1, keepdims=True), MIN_RANGE)
    s = max_x / qp
    return jnp.round(x / s), s


def _ref_per_tensor(x, qp):
    max_x = jnp.maximum(jnp.max(jnp.abs(x)), MIN_RANGE)
    s = max_x / qp
    return jnp.round(x / s), s


if __name__ == "__main__":
    key = jax.random.PRNGKey(0)
    k1, k2 = jax.random.split(key)
    # Transformer-like activation: batch=2, seq=8, hidden=32.
    x = jax.random.normal(k1, (2, 8, 32), dtype=jnp.float32)
    # Ragged row count (rows % row_tile != 0) to exercise the masked tail path.
    x_ragged = jax.random.normal(k2, (3, 5, 32), dtype=jnp.float32)

    qa_tok = QuantAct(N_bits=8, type="per_token", signed=True, symmetric=True)
    qa_ten = QuantAct(N_bits=8, type="per_tensor", signed=True, symmetric=True)

    for xin in (x, x_ragged):
        # per_token, int8 range, signed, symmetric
        q_tok, s_tok = qa_tok(xin)
        q_tok = jax.block_until_ready(q_tok)
        s_tok = jax.block_until_ready(s_tok)
        q_r, s_r = _ref_per_token(xin, qa_tok.Qp)
        assert q_tok.shape == xin.shape
        assert s_tok.shape == xin.shape[:-1] + (1,)
        assert jnp.allclose(q_tok, q_r, atol=1e-5)
        assert jnp.allclose(s_tok, s_r, atol=1e-7)

        # per_tensor, int8 range, signed, symmetric
        q_ten, s_ten = qa_ten(xin)
        q_ten = jax.block_until_ready(q_ten)
        s_ten = jax.block_until_ready(s_ten)
        q_r2, s_r2 = _ref_per_tensor(xin, qa_ten.Qp)
        assert q_ten.shape == xin.shape and s_ten.shape == ()
        assert jnp.allclose(q_ten, q_r2, atol=1e-5)
        assert jnp.allclose(s_ten, s_r2, atol=1e-7)

    # N_bits=None passthrough.
    qa_none = QuantAct(None, type="per_tensor")
    x_id, s_id = qa_none(x)
    assert jnp.allclose(x_id, x) and float(s_id) == 1.0

    print("KERNEL_OK")
</pallas_src>

<mosaic_0001>
module attributes {stable_mosaic.version = 11 : i64} {
  func.func @_per_token_kernel(%arg0: i32, %arg1: memref<16x32xf32, #tpu.memory_space<vmem>>, %arg2: memref<16x32xf32, #tpu.memory_space<vmem>>, %arg3: memref<16x1xf32, #tpu.memory_space<vmem>>) attributes {dimension_semantics = [#tpu.dimension_semantics<parallel>], iteration_bounds = array<i64: 1>, scalar_prefetch = 0 : i64, scratch_operands = 0 : i64, tpu.core_type = #tpu.core_type<tc>, window_params = [{transform_indices = @transform_0, window_bounds = array<i64: 16, 32>}, {transform_indices = @transform_1, window_bounds = array<i64: 16, 32>}, {transform_indices = @transform_2, window_bounds = array<i64: 16, 1>}]} {
    %c0 = arith.constant 0 : index
    %c0_0 = arith.constant 0 : index
    %0 = vector.load %arg1[%c0, %c0_0] : memref<16x32xf32, #tpu.memory_space<vmem>>, vector<16x32xf32>
    %1 = math.absf %0 : vector<16x32xf32>
    %cst = arith.constant dense<0xFF800000> : vector<16xf32>
    %2 = vector.multi_reduction <maximumf>, %1, %cst [1] : vector<16x32xf32> to vector<16xf32>
    %3 = vector.shape_cast %2 : vector<16xf32> to vector<16x1xf32>
    %cst_1 = arith.constant 9.99999997E-7 : f32
    %4 = vector.broadcast %cst_1 : f32 to vector<16x1xf32>
    %5 = arith.maximumf %3, %4 : vector<16x1xf32>
    %cst_2 = arith.constant 1.270000e+02 : f32
    %6 = vector.broadcast %cst_2 : f32 to vector<16x1xf32>
    %7 = arith.divf %5, %6 : vector<16x1xf32>
    %8 = vector.broadcast %7 : vector<16x1xf32> to vector<16x32xf32>
    %9 = arith.divf %0, %8 : vector<16x32xf32>
    %10 = math.roundeven %9 : vector<16x32xf32>
    %c0_3 = arith.constant 0 : index
    %c0_4 = arith.constant 0 : index
    %11 = vector.load %arg2[%c0_3, %c0_4] : memref<16x32xf32, #tpu.memory_space<vmem>>, vector<16x32xf32>
    tpu.vector_store %arg2[%c0_3, %c0_4], %10 {strides = array<i32>} : memref<16x32xf32, #tpu.memory_space<vmem>>, vector<16x32xf32>,
    %c0_5 = arith.constant 0 : index
    %c0_6 = arith.constant 0 : index
    %12 = vector.load %arg3[%c0_5, %c0_6] : memref<16x1xf32, #tpu.memory_space<vmem>>, vector<16x1xf32>
    tpu.vector_store %arg3[%c0_5, %c0_6], %7 {strides = array<i32>} : memref<16x1xf32, #tpu.memory_space<vmem>>, vector<16x1xf32>,
    return
  }
  func.func @transform_0(%arg0: i32) -> (i32, i32) {
    %c0_i32 = arith.constant 0 : i32
    %c0_i32_0 = arith.constant 0 : i32
    return %arg0, %c0_i32 : i32, i32
  }
  func.func @transform_1(%arg0: i32) -> (i32, i32) {
    %c0_i32 = arith.constant 0 : i32
    %c0_i32_0 = arith.constant 0 : i32
    return %arg0, %c0_i32 : i32, i32
  }
  func.func @transform_2(%arg0: i32) -> (i32, i32) {
    %c0_i32 = arith.constant 0 : i32
    %c0_i32_0 = arith.constant 0 : i32
    return %arg0, %c0_i32 : i32, i32
  }
}

</mosaic_0001>

<llo_original>
// kernel: tpu_custom_call.1
$region0: #{tpu_custom_call.1}
  #allocation0 [shape = 'u32[]', space=smem, size = 0x4, offset = 0x4, fixed_abs, tag = 'smem constant byte address 0x4 - core index']
  #allocation1 [shape = 'u32[72,128]{1,0:T(1,128)}', space=vmem, size = 0x9000, scoped, tag = 'internal scratch']
  %s0 = inlined_call_operand.hbm [shape: f32[16,32], index: 0, kind: input, shape index: {}]
  %s1 = inlined_call_operand.hbm [shape: f32[16,32], index: 1, kind: output, shape index: {0}]
  %s2 = inlined_call_operand.vmem [shape: f32[16,1], index: 2, kind: output, shape index: {1}]
  %3 = xla_tuple %s1, %s2
  %s4 = sld [smem:[#allocation0]]
  $region26: #{tpu_custom_call.1} parent=0
    _
  %s6 = ssub.s32 1, %s4
  %s7 = scalar_select 0, %s6, %s4
  $region1: #{tpu_custom_call.1} parent=0
    #allocation2 [shape = 'u8[8192]{0}', space=vmem, size = 0x2000, scoped, tag = 'input window, operand 0, single buffered']
    #allocation3 [shape = 's32[1]{0}', space=sflag, size = 0x4, scoped, tag = 'scoped memory for tpu_custom_call.1']
    #allocation4 [shape = 's32[1]{0}', space=sflag, size = 0x4, scoped, tag = 'scoped memory for tpu_custom_call.1']
    #allocation5 [shape = 'u8[8192]{0}', space=vmem, size = 0x2000, scoped, tag = 'output window, operand 0, single buffered']
    %8 = vsyncpa [#allocation3], 0
    %9 = vsyncpa [#allocation4], 0
    // Predicated region
    $region2: #{tpu_custom_call.1} parent=1 // pred_check
      _
    $region3: #{tpu_custom_call.1} parent=1 // pred_check_branch
      %11 = sbr.rel (0) target = $region5
    $region4: #{tpu_custom_call.1} parent=1 // pred_region
      %13 = vsyncadd [#allocation3], 0
      %s14 = sshll.u32 %s0, 4
      %s15 = int_to_ptr.hbm [resolvable:$true] %s14
      %s16 = sshll.u32 [#allocation2], 4
      %s17 = int_to_ptr.vmem [resolvable:$true] %s16
      %22 = dma.hbm_to_vmem [thread:$0]  %s15, 256, %s17, [#allocation3], 128, 128, 8
    $region5: #{tpu_custom_call.1} parent=1 // pred_fallthru
      _
    // Predicated region
    $region6: #{tpu_custom_call.1} parent=1 // pred_check
      _
    $region7: #{tpu_custom_call.1} parent=1 // pred_check_branch
      %24 = sbr.rel (0) target = $region9
    $region8: #{tpu_custom_call.1} parent=1 // pred_region
      %26 = dma.done [#allocation3], 256
    $region9: #{tpu_custom_call.1} parent=1 // pred_fallthru
      _
    %v27 = vld [vmem:[#allocation2] sm:$0xff]
    %v28 = vld [vmem:[#allocation2 + $0x8] sm:$0xff]
    %v29 = vand.u32 2147483647, %v27
    %v30 = vand.u32 2147483647, %v28
    %vm31 = vcmask 261120
    %v32 = vsel %vm31, %v29, -inf
    %33 = vmax.xlane.f32.xlu0 %v32
    %v34 = vpop.xlane.xlu0 %33
    %v35 = vsel %vm31, %v30, -inf
    %36 = vmax.xlane.f32.xlu0 %v35
    %v37 = vpop.xlane.xlu0 %36
    %v38 = vmax.f32 %v34, 1e-06
    %v39 = vmax.f32 %v37, 1e-06
    %v40 = vrcp.pop 127.0
    %v41 = vmul.f32 127.0, %v40
    %v42 = vsub.f32 1.0, %v41
    %v43 = vmul.f32 %v40, %v42
    %v44 = vadd.f32 %v40, %v43
    %vm45 = vweird.f32 %v40
    %v46 = vsel %vm45, %v40, %v44
    %v47 = vmul.f32 %v38, %v46
    %v48 = vmul.f32 %v39, %v46
    %v49 = vrcp.pop %v47
    %v50 = vmul.f32 %v47, %v49
    %v51 = vsub.f32 1.0, %v50
    %v52 = vmul.f32 %v49, %v51
    %v53 = vadd.f32 %v49, %v52
    %vm54 = vweird.f32 %v47
    %vm55 = vweird.f32 %v49
    %vm56 = vmor %vm54, %vm55
    %v57 = vsel %vm56, %v49, %v53
    %v58 = vand.u32 2147483647, %v47
    %vm59 = vcmp.eq.f32.partialorder %v58, 8.507059e+37
    %v60 = vand.u32 %v47, 2147483648
    %v61 = vor.u32 1.1754944e-38, %v60
    %v62 = vsel %vm59, %v61, %v57
    %v63 = vmul.f32 %v27, %v62
    %v64 = vrcp.pop %v48
    %v65 = vmul.f32 %v48, %v64
    %v66 = vsub.f32 1.0, %v65
    %v67 = vmul.f32 %v64, %v66
    %v68 = vadd.f32 %v64, %v67
    %vm69 = vweird.f32 %v48
    %vm70 = vweird.f32 %v64
    %vm71 = vmor %vm69, %vm70
    %v72 = vsel %vm71, %v64, %v68
    %v73 = vand.u32 2147483647, %v48
    %vm74 = vcmp.eq.f32.partialorder %v73, 8.507059e+37
    %v75 = vand.u32 %v48, 2147483648
    %v76 = vor.u32 1.1754944e-38, %v75
    %v77 = vsel %vm74, %v76, %v72
    %v78 = vmul.f32 %v28, %v77
    %v79 = vround.ne.pseudo %v63
    %v80 = vround.ne.pseudo %v78
    %81 = vst.msk [vmem:[#allocation5] sm:$0xff] %vm31, %v79
    %82 = vst.msk [vmem:[#allocation5 + $0x8] sm:$0xff] %vm31, %v80
    %vm83 = vcmask 7168
    %84 = vst.msk [vmem:[%s2] sm:$0xff] %vm83, %v47
    %85 = vst.msk [vmem:[%s2 + $0x8] sm:$0xff] %vm83, %v48
    // Predicated region
    $region10: #{tpu_custom_call.1} parent=1 // pred_check
      _
    $region11: #{tpu_custom_call.1} parent=1 // pred_check_branch
      %87 = sbr.rel (0) target = $region13
    $region12: #{tpu_custom_call.1} parent=1 // pred_region
      %89 = vsyncadd [#allocation4], 0
      %s90 = sshll.u32 [#allocation5], 4
      %s91 = int_to_ptr.vmem [resolvable:$true] %s90
      %s92 = sshll.u32 %s1, 4
      %s93 = int_to_ptr.hbm [resolvable:$true] %s92
      %98 = dma.vmem_to_hbm [thread:$0]  %s91, 256, %s93, [#allocation4], 128, 128, 8
    $region13: #{tpu_custom_call.1} parent=1 // pred_fallthru
      _
    // Predicated region
    $region14: #{tpu_custom_call.1} parent=1 // pred_check
      _
    $region15: #{tpu_custom_call.1} parent=1 // pred_check_branch
      %100 = sbr.rel (0) target = $region17
    $region16: #{tpu_custom_call.1} parent=1 // pred_region
      _
    $region17: #{tpu_custom_call.1} parent=1 // pred_fallthru
      _
    // Predicated region
    $region18: #{tpu_custom_call.1} parent=1 // pred_check
      _
    $region19: #{tpu_custom_call.1} parent=1 // pred_check_branch
      %102 = sbr.rel (0) target = $region21
    $region20: #{tpu_custom_call.1} parent=1 // pred_region
      %104 = dma.done [#allocation4], 256
    $region21: #{tpu_custom_call.1} parent=1 // pred_fallthru
      _
    // Predicated region
    $region22: #{tpu_custom_call.1} parent=1 // pred_check
      _
    $region23: #{tpu_custom_call.1} parent=1 // pred_check_branch
      %106 = sbr.rel (0) target = $region25
    $region24: #{tpu_custom_call.1} parent=1 // pred_region
      _
    $region25: #{tpu_custom_call.1} parent=1 // pred_fallthru
      _
    %107 = vsyncpa [#allocation3], 1
    %108 = vsyncpa [#allocation4], 1

</llo_original>
